<compile_context>
chip_gen: v7x
topology: tpu7x:2x2x1
jax: 0.10.0
libtpu: 0.0.40
codegen_flags: <defaults>
</compile_context>

<pallas_src>
import functools

import jax
import jax.numpy as jnp
from jax.experimental import pallas as pl
from jax.experimental.pallas import tpu as pltpu


def _round_up(x, m):
    return ((x + m - 1) // m) * m


def _mean_pool_kernel(x_ref, mask_ref, o_ref, acc_ref, cnt_ref):
    # Grid axes: (batch-tile i, hidden-tile h, seq-chunk j); j is the reduction.
    j = pl.program_id(2)

    @pl.when(j == 0)
    def _init():
        acc_ref[...] = jnp.zeros_like(acc_ref)
        cnt_ref[...] = jnp.zeros_like(cnt_ref)

    x = x_ref[...].astype(jnp.float32)      # (bb, ts, th)
    m = mask_ref[...].astype(jnp.float32)   # (bb, ts)

    # Masked partial sum over this sequence chunk (sublane reduce) + token count.
    acc_ref[...] += jnp.sum(x * m[:, :, None], axis=1)        # (bb, th)
    cnt_ref[...] += jnp.sum(m, axis=1, keepdims=True)         # (bb, 1)

    @pl.when(j == pl.num_programs(2) - 1)
    def _finish():
        denom = jnp.maximum(cnt_ref[...], jnp.float32(1e-9))  # torch.clamp(min=1e-9)
        o_ref[...] = (acc_ref[...] / denom).astype(o_ref.dtype)


def _pick_tiles(B, S, H, x_itemsize, budget_bytes):
    """Greedy VMEM-aware tile choice (bb, ts, th).

    bb: batch tile   (multiple of 8)
    ts: seq chunk    (multiple of 128 unless it equals S)
    th: hidden chunk (multiple of 128 unless it equals H)
    """
    bb = min(128, _round_up(B, 8))
    ts, th = S, H

    def nbytes(bb_, ts_, th_):
        # Double-buffered hidden-state tile dominates; add the f32 accumulator.
        return 2 * bb_ * ts_ * th_ * x_itemsize + bb_ * th_ * 4

    while nbytes(bb, ts, th) > budget_bytes and bb > 8:
        bb = max(8, (((bb // 2) + 7) // 8) * 8)
    while nbytes(bb, ts, th) > budget_bytes and ts > 128:
        ts = max(128, (((ts // 2) + 127) // 128) * 128)
    while nbytes(bb, ts, th) > budget_bytes and th > 128:
        th = max(128, (((th // 2) + 127) // 128) * 128)
    return bb, ts, th


@functools.partial(jax.jit, static_argnames=("vmem_budget_bytes",))
def mean_pooling(last_hidden_state, attention_mask, *,
                 vmem_budget_bytes=12 * 1024 * 1024):
    """last_hidden_state: (B, S, H); attention_mask: (B, S) int/float -> (B, H) f32."""
    B, S, H = last_hidden_state.shape
    assert attention_mask.shape == (B, S), attention_mask.shape

    bb, ts, th = _pick_tiles(B, S, H, last_hidden_state.dtype.itemsize,
                             vmem_budget_bytes)

    B_pad = _round_up(B, bb)
    S_pad = S if ts == S else _round_up(S, ts)
    H_pad = H if th == H else _round_up(H, th)

    x, msk = last_hidden_state, attention_mask
    if (B_pad, S_pad, H_pad) != (B, S, H):
        # Zero-padded mask rows/cols contribute nothing to sum or count; the
        # clamp keeps fully-padded rows finite (they are sliced off below).
        x = jnp.pad(x, ((0, B_pad - B), (0, S_pad - S), (0, H_pad - H)))
        msk = jnp.pad(msk, ((0, B_pad - B), (0, S_pad - S)))

    grid = (B_pad // bb, H_pad // th, S_pad // ts)

    out = pl.pallas_call(
        _mean_pool_kernel,
        out_shape=jax.ShapeDtypeStruct((B_pad, H_pad), jnp.float32),
        grid=grid,
        in_specs=[
            pl.BlockSpec((bb, ts, th), lambda i, h, j: (i, j, h)),  # hidden states
            pl.BlockSpec((bb, ts), lambda i, h, j: (i, j)),         # attention mask
        ],
        out_specs=pl.BlockSpec((bb, th), lambda i, h, j: (i, h)),
        scratch_shapes=[
            pltpu.VMEM((bb, th), jnp.float32),   # running masked sum
            pltpu.VMEM((bb, 1), jnp.float32),    # running token count
        ],
        compiler_params=pltpu.CompilerParams(
            dimension_semantics=("parallel", "parallel", "arbitrary")),
    )(x, msk)

    return out[:B, :H]


def _reference(x, mask):
    m = mask.astype(jnp.float32)[..., None]
    return (x.astype(jnp.float32) * m).sum(axis=1) / jnp.maximum(m.sum(axis=1), 1e-9)


if __name__ == "__main__":
    key = jax.random.PRNGKey(0)
    k1, k2, k3 = jax.random.split(key, 3)

    # --- Case 1: small shapes consistent with the module (batch=2, seq=8, hidden=32).
    B, S, H = 2, 8, 32
    x = jax.random.normal(k1, (B, S, H), dtype=jnp.float32)
    lengths = jnp.array([5, 8], dtype=jnp.int32)
    mask = (jnp.arange(S)[None, :] < lengths[:, None]).astype(jnp.int32)

    out = jax.block_until_ready(mean_pooling(x, mask))
    ref = _reference(x, mask)
    assert out.shape == (B, H), out.shape
    assert bool(jnp.all(jnp.isfinite(out)))
    assert bool(jnp.allclose(out, ref, atol=1e-5, rtol=1e-5)), float(
        jnp.max(jnp.abs(out - ref)))

    # --- Case 2: larger shapes with a tiny budget to exercise the tiled
    #             batch/seq/hidden reduction path (incl. batch padding).
    B2, S2, H2 = 12, 384, 256
    x2 = jax.random.normal(k2, (B2, S2, H2), dtype=jnp.float32)
    lens2 = jax.random.randint(k3, (B2,), 0, S2 + 1)
    mask2 = (jnp.arange(S2)[None, :] < lens2[:, None]).astype(jnp.int32)

    out2 = jax.block_until_ready(
        mean_pooling(x2, mask2, vmem_budget_bytes=1 << 20))
    ref2 = _reference(x2, mask2)
    assert out2.shape == (B2, H2), out2.shape
    assert bool(jnp.all(jnp.isfinite(out2)))
    assert bool(jnp.allclose(out2, ref2, atol=1e-4, rtol=1e-4)), float(
        jnp.max(jnp.abs(out2 - ref2)))

    print("KERNEL_OK")
</pallas_src>

<mosaic_0001>
module attributes {stable_mosaic.version = 11 : i64} {
  func.func @_mean_pool_kernel(%arg0: i32, %arg1: i32, %arg2: i32, %arg3: memref<8x8x32xf32, #tpu.memory_space<vmem>>, %arg4: memref<8x8xi32, #tpu.memory_space<vmem>>, %arg5: memref<8x32xf32, #tpu.memory_space<vmem>>, %arg6: memref<8x32xf32, #tpu.memory_space<vmem>>, %arg7: memref<8x1xf32, #tpu.memory_space<vmem>>) attributes {dimension_semantics = [#tpu.dimension_semantics<parallel>, #tpu.dimension_semantics<parallel>, #tpu.dimension_semantics<arbitrary>], iteration_bounds = array<i64: 1, 1, 1>, scalar_prefetch = 0 : i64, scratch_operands = 2 : i64, tpu.core_type = #tpu.core_type<tc>, window_params = [{transform_indices = @transform_0, window_bounds = array<i64: 8, 8, 32>}, {transform_indices = @transform_1, window_bounds = array<i64: 8, 8>}, {transform_indices = @transform_2, window_bounds = array<i64: 8, 32>}]} {
    %c0_i32 = arith.constant 0 : i32
    %0 = arith.cmpi eq, %arg2, %c0_i32 : i32
    %1 = arith.extui %0 : i1 to i32
    %c0_i32_0 = arith.constant 0 : i32
    %2 = arith.cmpi ne, %1, %c0_i32_0 : i32
    scf.if %2 {
      %cst_16 = arith.constant 0.000000e+00 : f32
      %21 = vector.broadcast %cst_16 : f32 to vector<8x32xf32>
      %c0_17 = arith.constant 0 : index
      %c0_18 = arith.constant 0 : index
      %22 = vector.load %arg6[%c0_17, %c0_18] : memref<8x32xf32, #tpu.memory_space<vmem>>, vector<8x32xf32>
      tpu.vector_store %arg6[%c0_17, %c0_18], %21 {strides = array<i32>} : memref<8x32xf32, #tpu.memory_space<vmem>>, vector<8x32xf32>,
      %cst_19 = arith.constant 0.000000e+00 : f32
      %23 = vector.broadcast %cst_19 : f32 to vector<8x1xf32>
      %c0_20 = arith.constant 0 : index
      %c0_21 = arith.constant 0 : index
      %24 = vector.load %arg7[%c0_20, %c0_21] : memref<8x1xf32, #tpu.memory_space<vmem>>, vector<8x1xf32>
      tpu.vector_store %arg7[%c0_20, %c0_21], %23 {strides = array<i32>} : memref<8x1xf32, #tpu.memory_space<vmem>>, vector<8x1xf32>,
    } else {
    }
    %c0 = arith.constant 0 : index
    %c0_1 = arith.constant 0 : index
    %c0_2 = arith.constant 0 : index
    %3 = vector.load %arg3[%c0, %c0_1, %c0_2] : memref<8x8x32xf32, #tpu.memory_space<vmem>>, vector<8x8x32xf32>
    %c0_3 = arith.constant 0 : index
    %c0_4 = arith.constant 0 : index
    %4 = vector.load %arg4[%c0_3, %c0_4] : memref<8x8xi32, #tpu.memory_space<vmem>>, vector<8x8xi32>
    %5 = arith.sitofp %4 : vector<8x8xi32> to vector<8x8xf32>
    %c0_5 = arith.constant 0 : index
    %c0_6 = arith.constant 0 : index
    %6 = vector.load %arg6[%c0_5, %c0_6] : memref<8x32xf32, #tpu.memory_space<vmem>>, vector<8x32xf32>
    %7 = vector.shape_cast %5 : vector<8x8xf32> to vector<8x8x1xf32>
    %8 = vector.broadcast %7 : vector<8x8x1xf32> to vector<8x8x32xf32>
    %9 = arith.mulf %3, %8 : vector<8x8x32xf32>
    %cst = arith.constant dense<0.000000e+00> : vector<8x32xf32>
    %10 = vector.multi_reduction <add>, %9, %cst [1] : vector<8x8x32xf32> to vector<8x32xf32>
    %11 = arith.addf %6, %10 : vector<8x32xf32>
    %c0_7 = arith.constant 0 : index
    %c0_8 = arith.constant 0 : index
    %12 = vector.load %arg6[%c0_7, %c0_8] : memref<8x32xf32, #tpu.memory_space<vmem>>, vector<8x32xf32>
    tpu.vector_store %arg6[%c0_7, %c0_8], %11 {strides = array<i32>} : memref<8x32xf32, #tpu.memory_space<vmem>>, vector<8x32xf32>,
    %c0_9 = arith.constant 0 : index
    %c0_10 = arith.constant 0 : index
    %13 = vector.load %arg7[%c0_9, %c0_10] : memref<8x1xf32, #tpu.memory_space<vmem>>, vector<8x1xf32>
    %cst_11 = arith.constant dense<0.000000e+00> : vector<8xf32>
    %14 = vector.multi_reduction <add>, %5, %cst_11 [1] : vector<8x8xf32> to vector<8xf32>
    %15 = vector.shape_cast %14 : vector<8xf32> to vector<8x1xf32>
    %16 = arith.addf %13, %15 : vector<8x1xf32>
    %c0_12 = arith.constant 0 : index
    %c0_13 = arith.constant 0 : index
    %17 = vector.load %arg7[%c0_12, %c0_13] : memref<8x1xf32, #tpu.memory_space<vmem>>, vector<8x1xf32>
    tpu.vector_store %arg7[%c0_12, %c0_13], %16 {strides = array<i32>} : memref<8x1xf32, #tpu.memory_space<vmem>>, vector<8x1xf32>,
    %c0_i32_14 = arith.constant 0 : i32
    %18 = arith.cmpi eq, %arg2, %c0_i32_14 : i32
    %19 = arith.extui %18 : i1 to i32
    %c0_i32_15 = arith.constant 0 : i32
    %20 = arith.cmpi ne, %19, %c0_i32_15 : i32
    scf.if %20 {
      %c0_16 = arith.constant 0 : index
      %c0_17 = arith.constant 0 : index
      %21 = vector.load %arg7[%c0_16, %c0_17] : memref<8x1xf32, #tpu.memory_space<vmem>>, vector<8x1xf32>
      %cst_18 = arith.constant 9.99999971E-10 : f32
      %22 = vector.broadcast %cst_18 : f32 to vector<8x1xf32>
      %23 = arith.maximumf %21, %22 : vector<8x1xf32>
      %c0_19 = arith.constant 0 : index
      %c0_20 = arith.constant 0 : index
      %24 = vector.load %arg6[%c0_19, %c0_20] : memref<8x32xf32, #tpu.memory_space<vmem>>, vector<8x32xf32>
      %25 = vector.broadcast %23 : vector<8x1xf32> to vector<8x32xf32>
      %26 = arith.divf %24, %25 : vector<8x32xf32>
      %c0_21 = arith.constant 0 : index
      %c0_22 = arith.constant 0 : index
      %27 = vector.load %arg5[%c0_21, %c0_22] : memref<8x32xf32, #tpu.memory_space<vmem>>, vector<8x32xf32>
      tpu.vector_store %arg5[%c0_21, %c0_22], %26 {strides = array<i32>} : memref<8x32xf32, #tpu.memory_space<vmem>>, vector<8x32xf32>,
    } else {
    }
    return
  }
  func.func @transform_0(%arg0: i32, %arg1: i32, %arg2: i32) -> (i32, i32, i32) {
    %c0_i32 = arith.constant 0 : i32
    return %arg0, %arg2, %arg1 : i32, i32, i32
  }
  func.func @transform_1(%arg0: i32, %arg1: i32, %arg2: i32) -> (i32, i32) {
    %c0_i32 = arith.constant 0 : i32
    return %arg0, %arg2 : i32, i32
  }
  func.func @transform_2(%arg0: i32, %arg1: i32, %arg2: i32) -> (i32, i32) {
    %c0_i32 = arith.constant 0 : i32
    return %arg0, %arg1 : i32, i32
  }
}

</mosaic_0001>

<llo_original>
// kernel: mean_pooling.1
$region0: #{mean_pooling.1}
  #allocation0 [shape = 'u32[]', space=smem, size = 0x4, offset = 0x4, fixed_abs, tag = 'smem constant byte address 0x4 - core index']
  #allocation1 [shape = 'u32[144,128]{1,0:T(1,128)}', space=vmem, size = 0x12000, scoped, tag = 'internal scratch']
  #allocation2 [shape = 'f32[8,32]{1,0:T(8,128)}', space=vmem, size = 0x1000, scoped, tag = 'scratch operand']
  #allocation3 [shape = 'f32[8,1]{1,0:T(8,128)}', space=vmem, size = 0x1000, scoped, tag = 'scratch operand']
  %s0 = inlined_call_operand.vmem [shape: f32[8,8,32], index: 0, kind: input, shape index: {}]
  %s1 = inlined_call_operand.vmem [shape: s32[8,8], index: 1, kind: input, shape index: {}]
  %s2 = inlined_call_operand.vmem [shape: f32[8,32], index: 2, kind: output, shape index: {}]
  %s3 = sld [smem:[#allocation0]]
  $region26: #{mean_pooling.1} parent=0
    _
  %s5 = ssub.s32 1, %s3
  %s6 = scalar_select 0, %s5, %s3
  // Predicated region
  $region2: #{mean_pooling.1} parent=0 // pred_check
    _
  $region3: #{mean_pooling.1} parent=0 // pred_check_branch
    %8 = sbr.rel (0) target = $region5
  $region4: #{mean_pooling.1} parent=0 // pred_region
    _
  $region5: #{mean_pooling.1} parent=0 // pred_fallthru
    _
  // Predicated region
  $region6: #{mean_pooling.1} parent=0 // pred_check
    _
  $region7: #{mean_pooling.1} parent=0 // pred_check_branch
    %10 = sbr.rel (0) target = $region9
  $region8: #{mean_pooling.1} parent=0 // pred_region
    _
  $region9: #{mean_pooling.1} parent=0 // pred_fallthru
    _
  %p11 = scmp.eq.s32.totalorder 0, 0
  // Predicated region
  $region10: #{mean_pooling.1} parent=0 // pred_check
    %p12 = pneg %p11
  $region11: #{mean_pooling.1} parent=0 // pred_check_branch
    %14 = sbr.rel (%p12) target = $region13
  $region12: #{mean_pooling.1} parent=0 // pred_region
    %vm15 = vcmask 261120
    %16 = vst.msk [vmem:[#allocation2] sm:$0xff] %vm15, 0.0
    %vm17 = vcmask 7168
    %18 = vst.msk [vmem:[#allocation3] sm:$0xff] %vm17, 0.0
  $region13: #{mean_pooling.1} parent=0 // pred_fallthru
    _
  %v19 = vld [vmem:[%s0] sm:$0xff]
  %v20 = vld [vmem:[%s0 + $0x8] sm:$0xff]
  %v21 = vld [vmem:[%s0 + $0x10] sm:$0xff]
  %v22 = vld [vmem:[%s0 + $0x18] sm:$0xff]
  %v23 = vld [vmem:[%s0 + $0x20] sm:$0xff]
  %v24 = vld [vmem:[%s0 + $0x28] sm:$0xff]
  %v25 = vld [vmem:[%s0 + $0x30] sm:$0xff]
  %v26 = vld [vmem:[%s0 + $0x38] sm:$0xff]
  %v27 = vld [vmem:[%s1] sm:$0xff]
  %v28 = vcvt.s32.f32 %v27
  %v29 = vld [vmem:[#allocation2] sm:$0xff]
  %v30 = vlaneseq
  %v31 = vshrl.u32 %v30, 7
  %v32 = vsub.s32 0, %v31
  %v33 = vrot.slane %v28, %v32
  %35 = vbcast.lane.b32.xlu0 %v33, 256
  %v36 = vpop.permute.xlu0 %35
  %v37 = vlaneseq
  %v38 = vshrl.u32 %v37, 7
  %v39 = vsub.s32 1, %v38
  %v40 = vrot.slane %v28, %v39
  %42 = vbcast.lane.b32.xlu0 %v40, 256
  %v43 = vpop.permute.xlu0 %42
  %v44 = vlaneseq
  %v45 = vshrl.u32 %v44, 7
  %v46 = vsub.s32 2, %v45
  %v47 = vrot.slane %v28, %v46
  %49 = vbcast.lane.b32.xlu0 %v47, 256
  %v50 = vpop.permute.xlu0 %49
  %v51 = vlaneseq
  %v52 = vshrl.u32 %v51, 7
  %v53 = vsub.s32 3, %v52
  %v54 = vrot.slane %v28, %v53
  %56 = vbcast.lane.b32.xlu0 %v54, 256
  %v57 = vpop.permute.xlu0 %56
  %v58 = vlaneseq
  %v59 = vshrl.u32 %v58, 7
  %v60 = vsub.s32 4, %v59
  %v61 = vrot.slane %v28, %v60
  %63 = vbcast.lane.b32.xlu0 %v61, 256
  %v64 = vpop.permute.xlu0 %63
  %v65 = vlaneseq
  %v66 = vshrl.u32 %v65, 7
  %v67 = vsub.s32 5, %v66
  %v68 = vrot.slane %v28, %v67
  %70 = vbcast.lane.b32.xlu0 %v68, 256
  %v71 = vpop.permute.xlu0 %70
  %v72 = vlaneseq
  %v73 = vshrl.u32 %v72, 7
  %v74 = vsub.s32 6, %v73
  %v75 = vrot.slane %v28, %v74
  %77 = vbcast.lane.b32.xlu0 %v75, 256
  %v78 = vpop.permute.xlu0 %77
  %v79 = vlaneseq
  %v80 = vshrl.u32 %v79, 7
  %v81 = vsub.s32 7, %v80
  %v82 = vrot.slane %v28, %v81
  %84 = vbcast.lane.b32.xlu0 %v82, 256
  %v85 = vpop.permute.xlu0 %84
  %v86 = vmul.f32 %v19, %v36
  %v87 = vmul.f32 %v20, %v43
  %v88 = vmul.f32 %v21, %v50
  %v89 = vmul.f32 %v22, %v57
  %v90 = vmul.f32 %v23, %v64
  %v91 = vmul.f32 %v24, %v71
  %v92 = vmul.f32 %v25, %v78
  %v93 = vmul.f32 %v26, %v85
  %vm94 = vcmask 261120
  %v95 = vsel %vm94, %v86, 0.0
  %v96 = vrot.slane %v95, 4
  %v97 = vadd.f32 %v95, %v96
  %v98 = vrot.slane %v97, 2
  %v99 = vadd.f32 %v97, %v98
  %v100 = vrot.slane %v99, 1
  %v101 = vadd.f32 %v99, %v100
  %v102 = vsel %vm94, %v87, 0.0
  %v103 = vrot.slane %v102, 4
  %v104 = vadd.f32 %v102, %v103
  %v105 = vrot.slane %v104, 2
  %v106 = vadd.f32 %v104, %v105
  %v107 = vrot.slane %v106, 1
  %v108 = vadd.f32 %v106, %v107
  %v109 = vsel %vm94, %v88, 0.0
  %v110 = vrot.slane %v109, 4
  %v111 = vadd.f32 %v109, %v110
  %v112 = vrot.slane %v111, 2
  %v113 = vadd.f32 %v111, %v112
  %v114 = vrot.slane %v113, 1
  %v115 = vadd.f32 %v113, %v114
  %v116 = vsel %vm94, %v89, 0.0
  %v117 = vrot.slane %v116, 4
  %v118 = vadd.f32 %v116, %v117
  %v119 = vrot.slane %v118, 2
  %v120 = vadd.f32 %v118, %v119
  %v121 = vrot.slane %v120, 1
  %v122 = vadd.f32 %v120, %v121
  %v123 = vsel %vm94, %v90, 0.0
  %v124 = vrot.slane %v123, 4
  %v125 = vadd.f32 %v123, %v124
  %v126 = vrot.slane %v125, 2
  %v127 = vadd.f32 %v125, %v126
  %v128 = vrot.slane %v127, 1
  %v129 = vadd.f32 %v127, %v128
  %v130 = vsel %vm94, %v91, 0.0
  %v131 = vrot.slane %v130, 4
  %v132 = vadd.f32 %v130, %v131
  %v133 = vrot.slane %v132, 2
  %v134 = vadd.f32 %v132, %v133
  %v135 = vrot.slane %v134, 1
  %v136 = vadd.f32 %v134, %v135
  %v137 = vsel %vm94, %v92, 0.0
  %v138 = vrot.slane %v137, 4
  %v139 = vadd.f32 %v137, %v138
  %v140 = vrot.slane %v139, 2
  %v141 = vadd.f32 %v139, %v140
  %v142 = vrot.slane %v141, 1
  %v143 = vadd.f32 %v141, %v142
  %v144 = vsel %vm94, %v93, 0.0
  %v145 = vrot.slane %v144, 4
  %v146 = vadd.f32 %v144, %v145
  %v147 = vrot.slane %v146, 2
  %v148 = vadd.f32 %v146, %v147
  %v149 = vrot.slane %v148, 1
  %v150 = vadd.f32 %v148, %v149
  %vm159 = vcmask 1041409
  %v160 = vsel %vm159, %v108, %v101
  %vm161 = vcmask 1042434
  %v162 = vsel %vm161, %v115, %v160
  %vm163 = vcmask 1043459
  %v164 = vsel %vm163, %v122, %v162
  %vm165 = vcmask 1044484
  %v166 = vsel %vm165, %v129, %v164
  %vm167 = vcmask 1045509
  %v168 = vsel %vm167, %v136, %v166
  %vm169 = vcmask 1046534
  %v170 = vsel %vm169, %v143, %v168
  %vm171 = vcmask 1047559
  %v172 = vsel %vm171, %v150, %v170
  %v174 = vadd.f32 %v29, %v172
  %175 = vst.msk [vmem:[#allocation2] sm:$0xff] %vm94, %v174
  %v176 = vld [vmem:[#allocation3] sm:$0xff]
  %vm177 = vcmask 64512
  %v178 = vsel %vm177, %v28, 0.0
  %179 = vadd.xlane.f32.xlu0 %v178
  %v180 = vpop.xlane.xlu0 %179
  %v181 = vadd.f32 %v176, %v180
  %vm182 = vcmask 7168
  %183 = vst.msk [vmem:[#allocation3] sm:$0xff] %vm182, %v181
  // Predicated region
  $region14: #{mean_pooling.1} parent=0 // pred_check
    %p184 = pneg %p11
  $region15: #{mean_pooling.1} parent=0 // pred_check_branch
    %186 = sbr.rel (%p184) target = $region17
  $region16: #{mean_pooling.1} parent=0 // pred_region
    %v187 = vld [vmem:[#allocation3] sm:$0xff]
    %v188 = vmax.f32 %v187, 1e-09
    %v189 = vld [vmem:[#allocation2] sm:$0xff]
    %191 = vset.pattern.permute.xlu0 0
    %192 = vperm.xlu0 %191, %v188
    %v193 = vpop.permute.xlu0 %192
    %v195 = vrcp.pop %v193
    %v196 = vmul.f32 %v189, %v195
    %197 = vst.msk [vmem:[%s2] sm:$0xff] %vm94, %v196
  $region17: #{mean_pooling.1} parent=0 // pred_fallthru
    _
  // Predicated region
  $region18: #{mean_pooling.1} parent=0 // pred_check
    _
  $region19: #{mean_pooling.1} parent=0 // pred_check_branch
    %199 = sbr.rel (0) target = $region21
  $region20: #{mean_pooling.1} parent=0 // pred_region
    _
  $region21: #{mean_pooling.1} parent=0 // pred_fallthru
    _
  // Predicated region
  $region22: #{mean_pooling.1} parent=0 // pred_check
    _
  $region23: #{mean_pooling.1} parent=0 // pred_check_branch
    %201 = sbr.rel (0) target = $region25
  $region24: #{mean_pooling.1} parent=0 // pred_region
    _
  $region25: #{mean_pooling.1} parent=0 // pred_fallthru
    _

</llo_original>
